<compile_context>
chip_gen: v7x
topology: tpu7x:2x2x1
jax: 0.10.0
libtpu: 0.0.40
codegen_flags: <defaults>
</compile_context>

<pallas_src>
import jax
import jax.numpy as jnp
from jax.experimental import pallas as pl
from jax.experimental.pallas import tpu as pltpu


def _round_up(x, m):
    return ((x + m - 1) // m) * m


# ----------------------------------------------------------------------------
# Pallas kernel: fused matmul + bias
# ----------------------------------------------------------------------------
def _linear_kernel(x_ref, w_ref, b_ref, o_ref):
    acc = jnp.dot(x_ref[...], w_ref[...], preferred_element_type=jnp.float32)
    o_ref[...] = (acc + b_ref[...]).astype(o_ref.dtype)


# ----------------------------------------------------------------------------
# Wrapper (padding + pallas_call plumbing)
# ----------------------------------------------------------------------------
def linear(x, w, b, tm=256):
    """x: [M, K], w: [K, N], b: [N] -> [M, N] via a single fused Pallas kernel.

    K is left unpadded (full-array block dim); N is padded to 128 so the output
    tile is lane-dense; M is padded to a multiple of the tile and iterated on a
    "parallel" grid axis.
    """
    M, K = x.shape
    N = w.shape[1]
    out_dtype = x.dtype

    Np = _round_up(N, 128)                 # lane-dense output width
    TM = min(tm, _round_up(M, 8))          # rows per grid step (multiple of 8)
    Mp = _round_up(M, TM)                  # grid divides evenly

    xp = jnp.pad(x, ((0, Mp - M), (0, 0)))            # no K padding
    wp = jnp.pad(w, ((0, 0), (0, Np - N)))            # no K padding
    bp = jnp.pad(b, (0, Np - N)).reshape(1, Np)

    out = pl.pallas_call(
        _linear_kernel,
        out_shape=jax.ShapeDtypeStruct((Mp, Np), out_dtype),
        grid=(Mp // TM,),
        in_specs=[
            pl.BlockSpec((TM, K), lambda i: (i, 0)),   # x tile (K = full dim)
            pl.BlockSpec((K, Np), lambda i: (0, 0)),   # weight, VMEM-resident
            pl.BlockSpec((1, Np), lambda i: (0, 0)),   # bias row, VMEM-resident
        ],
        out_specs=pl.BlockSpec((TM, Np), lambda i: (i, 0)),
        compiler_params=pltpu.CompilerParams(
            dimension_semantics=("parallel",)),        # megacore-shardable
    )(xp, wp, bp)
    return out[:M, :N]


# ----------------------------------------------------------------------------
# Model
# ----------------------------------------------------------------------------
def init_params(key):
    kw, kb = jax.random.split(key, 2)
    f32 = jnp.float32
    return {
        # stored as [in_features, out_features] == torch weight.T
        "fc_w": jax.random.normal(kw, (10, 10), f32) * 0.1,
        "fc_b": jax.random.normal(kb, (10,), f32) * 0.01,
    }


@jax.jit
def model_forward(x, params):
    # SingleLayerModel.forward: x = self.fc(x)
    return linear(x, params["fc_w"], params["fc_b"])


if __name__ == "__main__":
    key = jax.random.PRNGKey(0)
    kx, kp = jax.random.split(key, 2)

    # nn.Linear(10, 10) implies feature dim 10; small batch of 2.
    x = jax.random.normal(kx, (2, 10), jnp.float32)
    params = init_params(kp)

    out = jax.block_until_ready(model_forward(x, params))
    assert out.shape == (2, 10), out.shape
    assert bool(jnp.all(jnp.isfinite(out)))

    # Reference check against plain JAX linear.
    ref = x @ params["fc_w"] + params["fc_b"]
    assert bool(jnp.allclose(out, ref, atol=1e-5, rtol=1e-5))
    print("KERNEL_OK")
</pallas_src>

<mosaic_0001>
module attributes {stable_mosaic.version = 11 : i64} {
  func.func @_linear_kernel(%arg0: i32, %arg1: memref<8x10xf32, #tpu.memory_space<vmem>>, %arg2: memref<10x128xf32, #tpu.memory_space<vmem>>, %arg3: memref<1x128xf32, #tpu.memory_space<vmem>>, %arg4: memref<8x128xf32, #tpu.memory_space<vmem>>) attributes {dimension_semantics = [#tpu.dimension_semantics<parallel>], iteration_bounds = array<i64: 1>, scalar_prefetch = 0 : i64, scratch_operands = 0 : i64, tpu.core_type = #tpu.core_type<tc>, window_params = [{transform_indices = @transform_0, window_bounds = array<i64: 8, 10>}, {pipeline_mode = #tpu.pipeline_mode<synchronous>, transform_indices = @transform_1, window_bounds = array<i64: 10, 128>}, {pipeline_mode = #tpu.pipeline_mode<synchronous>, transform_indices = @transform_2, window_bounds = array<i64: 1, 128>}, {transform_indices = @transform_3, window_bounds = array<i64: 8, 128>}]} {
    %c0 = arith.constant 0 : index
    %c0_0 = arith.constant 0 : index
    %0 = vector.load %arg1[%c0, %c0_0] : memref<8x10xf32, #tpu.memory_space<vmem>>, vector<8x10xf32>
    %c0_1 = arith.constant 0 : index
    %c0_2 = arith.constant 0 : index
    %1 = vector.load %arg2[%c0_1, %c0_2] : memref<10x128xf32, #tpu.memory_space<vmem>>, vector<10x128xf32>
    %cst = arith.constant dense<0.000000e+00> : vector<8x128xf32>
    %2 = tpu.matmul %0, %1, %cst {dimension_numbers = #tpu.dot_dimension_numbers<[1], [0], [0], [1], [0, 0, 1, 1], [], []>} : vector<8x10xf32>, vector<10x128xf32>, vector<8x128xf32> -> vector<8x128xf32>
    %c0_3 = arith.constant 0 : index
    %c0_4 = arith.constant 0 : index
    %3 = vector.load %arg3[%c0_3, %c0_4] : memref<1x128xf32, #tpu.memory_space<vmem>>, vector<1x128xf32>
    %4 = vector.broadcast %3 : vector<1x128xf32> to vector<8x128xf32>
    %5 = arith.addf %2, %4 : vector<8x128xf32>
    %c0_5 = arith.constant 0 : index
    %c0_6 = arith.constant 0 : index
    %6 = vector.load %arg4[%c0_5, %c0_6] : memref<8x128xf32, #tpu.memory_space<vmem>>, vector<8x128xf32>
    tpu.vector_store %arg4[%c0_5, %c0_6], %5 {strides = array<i32>} : memref<8x128xf32, #tpu.memory_space<vmem>>, vector<8x128xf32>,
    return
  }
  func.func @transform_0(%arg0: i32) -> (i32, i32) {
    %c0_i32 = arith.constant 0 : i32
    %c0_i32_0 = arith.constant 0 : i32
    return %arg0, %c0_i32 : i32, i32
  }
  func.func @transform_1(%arg0: i32) -> (i32, i32) {
    %c0_i32 = arith.constant 0 : i32
    %c0_i32_0 = arith.constant 0 : i32
    %c0_i32_1 = arith.constant 0 : i32
    return %c0_i32, %c0_i32_0 : i32, i32
  }
  func.func @transform_2(%arg0: i32) -> (i32, i32) {
    %c0_i32 = arith.constant 0 : i32
    %c0_i32_0 = arith.constant 0 : i32
    %c0_i32_1 = arith.constant 0 : i32
    return %c0_i32, %c0_i32_0 : i32, i32
  }
  func.func @transform_3(%arg0: i32) -> (i32, i32) {
    %c0_i32 = arith.constant 0 : i32
    %c0_i32_0 = arith.constant 0 : i32
    return %arg0, %c0_i32 : i32, i32
  }
}

</mosaic_0001>

<llo_original>
// kernel: model_forward.1
$region0: #{model_forward.1}
  #allocation0 [shape = 'u32[]', space=smem, size = 0x4, offset = 0x4, fixed_abs, tag = 'smem constant byte address 0x4 - core index']
  #allocation1 [shape = 'u32[144,128]{1,0:T(1,128)}', space=vmem, size = 0x12000, scoped, tag = 'internal scratch']
  %s0 = inlined_call_operand.vmem [shape: f32[8,10], index: 0, kind: input, shape index: {}]
  %s1 = inlined_call_operand.vmem [shape: f32[10,128], index: 1, kind: input, shape index: {}]
  %s2 = inlined_call_operand.vmem [shape: f32[1,128], index: 2, kind: input, shape index: {}]
  %s3 = inlined_call_operand.vmem [shape: f32[8,128], index: 3, kind: output, shape index: {}]
  %s4 = sld [smem:[#allocation0]]
  $region22: #{model_forward.1} parent=0
    _
  %s6 = ssub.s32 1, %s4
  %s7 = scalar_select 0, %s6, %s4
  // Predicated region
  $region2: #{model_forward.1} parent=0 // pred_check
    _
  $region3: #{model_forward.1} parent=0 // pred_check_branch
    %9 = sbr.rel (0) target = $region5
  $region4: #{model_forward.1} parent=0 // pred_region
    _
  $region5: #{model_forward.1} parent=0 // pred_fallthru
    _
  // Predicated region
  $region6: #{model_forward.1} parent=0 // pred_check
    _
  $region7: #{model_forward.1} parent=0 // pred_check_branch
    %11 = sbr.rel (0) target = $region9
  $region8: #{model_forward.1} parent=0 // pred_region
    _
  $region9: #{model_forward.1} parent=0 // pred_fallthru
    _
  // Predicated region
  $region10: #{model_forward.1} parent=0 // pred_check
    _
  $region11: #{model_forward.1} parent=0 // pred_check_branch
    %13 = sbr.rel (0) target = $region13
  $region12: #{model_forward.1} parent=0 // pred_region
    _
  $region13: #{model_forward.1} parent=0 // pred_fallthru
    _
  %v14 = vld [vmem:[%s0] sm:$0xff]
  %v15 = vld [vmem:[%s1] sm:$0xff]
  %v16 = vld [vmem:[%s1 + $0x8] sm:$0x3]
  %v17 = vld [vmem:[%s2] sm:$0x1]
  %v19 = vlaneseq
  %v20 = vshrl.u32 %v19, 7
  %v21 = vsub.s32 0, %v20
  %v22 = vrot.slane %v17, %v21
  %vm24 = vcmask 80896
  %v26 = vsel %vm24, %v14, 0
  %vm28 = vcmask 1041408
  %v30 = vsel %vm28, %v16, 0
  %32 = vmatprep.subr.mxu0 0.0
  %33 = vmatpush1.msra.mxu0 %v15
  %34 = vmatprep.subr.mxu0 0.0
  %35 = vmatpush1.msra.mxu0 %v30
  %36 = vmatprep.subr.mxu0 0.0
  %37 = vmatpush1.msra.mxu0 0.0
  %38 = vmatprep.subr.mxu0 0.0
  %39 = vmatpush1.msra.mxu0 0.0
  %40 = vmatprep.subr.mxu0 0.0
  %41 = vmatpush1.msra.mxu0 0.0
  %42 = vmatprep.subr.mxu0 0.0
  %43 = vmatpush1.msra.mxu0 0.0
  %44 = vmatprep.subr.mxu0 0.0
  %45 = vmatpush1.msra.mxu0 0.0
  %46 = vmatprep.subr.mxu0 0.0
  %47 = vmatpush1.msra.mxu0 0.0
  %48 = vmatprep.subr.mxu0 0.0
  %49 = vmatpush1.msra.mxu0 0.0
  %50 = vmatprep.subr.mxu0 0.0
  %51 = vmatpush1.msra.mxu0 0.0
  %52 = vmatprep.subr.mxu0 0.0
  %53 = vmatpush1.msra.mxu0 0.0
  %54 = vmatprep.subr.mxu0 0.0
  %55 = vmatpush1.msra.mxu0 0.0
  %56 = vmatprep.subr.mxu0 0.0
  %57 = vmatpush1.msra.mxu0 0.0
  %58 = vmatprep.subr.mxu0 0.0
  %59 = vmatpush1.msra.mxu0 0.0
  %60 = vmatprep.subr.mxu0 0.0
  %61 = vmatpush1.msra.mxu0 0.0
  %62 = vmatprep.subr.mxu0 0.0
  %63 = vmatpush1.msra.mxu0 0.0
  %64 = vmatprep.subr.mxu0 0.0
  %65 = vmatpush1.msra.mxu0 0.0
  %66 = vmatprep.subr.mxu0 0.0
  %67 = vmatpush1.msra.mxu0 0.0
  %68 = vmatprep.subr.mxu0 0.0
  %69 = vmatpush1.msra.mxu0 0.0
  %70 = vmatprep.subr.mxu0 0.0
  %71 = vmatpush1.msra.mxu0 0.0
  %72 = vmatprep.subr.mxu0 0.0
  %73 = vmatpush1.msra.mxu0 0.0
  %74 = vmatprep.subr.mxu0 0.0
  %75 = vmatpush1.msra.mxu0 0.0
  %76 = vmatprep.subr.mxu0 0.0
  %77 = vmatpush1.msra.mxu0 0.0
  %78 = vmatprep.subr.mxu0 0.0
  %79 = vmatpush1.msra.mxu0 0.0
  %80 = vmatprep.subr.mxu0 0.0
  %81 = vmatpush1.msra.mxu0 0.0
  %82 = vmatprep.subr.mxu0 0.0
  %83 = vmatpush1.msra.mxu0 0.0
  %84 = vmatprep.subr.mxu0 0.0
  %85 = vmatpush1.msra.mxu0 0.0
  %86 = vmatprep.subr.mxu0 0.0
  %87 = vmatpush1.msra.mxu0 0.0
  %88 = vmatprep.subr.mxu0 0.0
  %89 = vmatpush1.msra.mxu0 0.0
  %90 = vmatprep.subr.mxu0 0.0
  %91 = vmatpush1.msra.mxu0 0.0
  %92 = vmatprep.subr.mxu0 0.0
  %93 = vmatpush1.msra.mxu0 0.0
  %94 = vmatprep.subr.mxu0 0.0
  %95 = vmatpush1.msra.mxu0 0.0
  %96 = vmatprep.mubr.f32.mxu0 0.0
  %97 = vmatmul.mubr.f32.gmra.mrb[0].mxu0 %v26
  %v98 = vpop.f32.mrb[0].mxu0
  %v99 = vadd.f32 %v22, %v98
  %v100 = vpop.f32.mrb[0].mxu0
  %101 = vdwg.mxu0
  %102 = vst [vmem:[%s3] sm:$0xff] %v99
  // Predicated region
  $region14: #{model_forward.1} parent=0 // pred_check
    _
  $region15: #{model_forward.1} parent=0 // pred_check_branch
    %104 = sbr.rel (0) target = $region17
  $region16: #{model_forward.1} parent=0 // pred_region
    _
  $region17: #{model_forward.1} parent=0 // pred_fallthru
    _
  // Predicated region
  $region18: #{model_forward.1} parent=0 // pred_check
    _
  $region19: #{model_forward.1} parent=0 // pred_check_branch
    %106 = sbr.rel (0) target = $region21
  $region20: #{model_forward.1} parent=0 // pred_region
    _
  $region21: #{model_forward.1} parent=0 // pred_fallthru
    _

</llo_original>
